<compile_context>
chip_gen: v5e
topology: v5e:2x2
jax: 0.10.0
libtpu: 0.0.40
codegen_flags: <defaults>
</compile_context>

<pallas_src>
import functools

import jax
import jax.numpy as jnp
from jax.experimental import pallas as pl
from jax.experimental.pallas import tpu as pltpu

EPS = 1e-5                      # nn.BatchNorm2d default
NEG_SLOPE = 0.1                 # nn.LeakyReLU(0.1) per add_conv

_BUDGET = None


# ----------------------------------------------------------------------------- budget / tile pickers
def _vmem_budget():
    """~3/4 of physical VMEM, capped at 100 MiB  (=> ~96 MiB on v5e/v6e, ~48 MiB on v7x)."""
    global _BUDGET
    if _BUDGET is None:
        cap = 0
        try:
            info = pltpu.get_tpu_info()
            cap = int(getattr(info, "vmem_capacity_bytes", 0) or 0)
        except Exception:
            cap = 0
        if cap <= 0:
            cap = 64 * 1024 * 1024                       # conservative fallback
        _BUDGET = min((cap * 3) // 4, 100 * 1024 * 1024)
    return _BUDGET


def _pick_row_tile(m, row_bytes, budget):
    """Largest row tile (multiple of 8, divides m) fitting a slice of the VMEM budget."""
    cap = max(8, (budget // 3) // max(1, row_bytes))
    for cand in (4096, 2048, 1024, 512, 256, 128, 64, 32, 16, 8):
        if cand <= m and cand <= cap and m % cand == 0:
            return cand
    return m  # single full-extent block (still a valid BlockSpec)


def _pick_cout_tile(cout, cmid, budget):
    """Largest Cout tile (divisor of Cout, preferring multiples of 128) whose double-buffered
    packed weight block stays within ~1/4 of the budget."""
    fitting = [tc for tc in range(1, cout + 1)
               if cout % tc == 0 and 2 * 9 * cmid * tc * 4 <= budget // 4]
    if not fitting:
        return cout
    mult128 = [tc for tc in fitting if tc % 128 == 0]
    return max(mult128) if mult128 else max(fitting)


def _pick_h_tile(h, w_sp, cmid, tcout, budget):
    """Largest H tile (divisor of H) bounding all per-step temps of call B."""
    fixed = 2 * 9 * cmid * tcout * 4                         # double-buffered packed weights
    per_row = 4 * w_sp * (10 * cmid + 4 * tcout)             # blocks + scratch + taps + acc + out
    avail = max(0, (budget * 3) // 5 - fixed)
    cap = max(1, avail // max(1, per_row))
    best = 1
    for th in range(1, h + 1):
        if h % th == 0 and th <= cap:
            best = th
    return best


def _cparams(semantics, budget):
    return pltpu.CompilerParams(dimension_semantics=semantics, vmem_limit_bytes=budget)


def _leaky(z):
    return jnp.where(z > 0, z, NEG_SLOPE * z)


# ----------------------------------------------------------------------------- kernels
def conv1x1_stats_kernel(x_ref, w_ref, y_ref, st_ref):
    # x_ref: [TM, Cin], w_ref: [Cin, Cmid], st_ref: [8, Cmid] (rows 0/1 used)
    y = jnp.dot(x_ref[...], w_ref[...], preferred_element_type=jnp.float32)
    y_ref[...] = y
    st_ref[0:1, :] = jnp.sum(y, axis=0, keepdims=True)
    st_ref[1:2, :] = jnp.sum(y * y, axis=0, keepdims=True)


def fused_bn_res_conv1x1_kernel(y2_ref, s_ref, b_ref, r_ref, w_ref, x_ref, y_ref, st_ref):
    # Previous block's BN2-apply + leaky + residual, fused with this block's 1x1 conv.
    xa = _leaky(y2_ref[...] * s_ref[...] + b_ref[...]) + r_ref[...]
    x_ref[...] = xa
    y = jnp.dot(xa, w_ref[...], preferred_element_type=jnp.float32)
    y_ref[...] = y
    st_ref[0:1, :] = jnp.sum(y, axis=0, keepdims=True)
    st_ref[1:2, :] = jnp.sum(y * y, axis=0, keepdims=True)


def fused_bn_conv1x1_kernel(y2_ref, s_ref, b_ref, w_ref, x_ref, y_ref, st_ref):
    xa = _leaky(y2_ref[...] * s_ref[...] + b_ref[...])
    x_ref[...] = xa
    y = jnp.dot(xa, w_ref[...], preferred_element_type=jnp.float32)
    y_ref[...] = y
    st_ref[0:1, :] = jnp.sum(y, axis=0, keepdims=True)
    st_ref[1:2, :] = jnp.sum(y * y, axis=0, keepdims=True)


def conv3x3_stats_kernel(top_ref, mid_ref, bot_ref, w_ref, s1_ref, b1_ref,
                         y2_ref, st_ref, hp_ref, *, TH, W, cmid, tcout, pack_taps):
    # top/bot_ref: [W, Cmid] halo rows (edge-clamped; zeroed at image borders)
    # mid_ref    : [TH, W, Cmid] raw conv1 rows of this tile
    # w_ref      : [3, 3*Cmid, TCout] 3x3 taps packed along K per row offset
    # hp_ref     : [TH+2, W+2, Cmid] VMEM scratch (halo + BN1 + leaky), built once per (i, j)
    j = pl.program_id(1)
    c = pl.program_id(2)
    nH = pl.num_programs(1)

    @pl.when(c == 0)
    def _build():
        s1 = s1_ref[...].reshape(1, 1, cmid)
        b1 = b1_ref[...].reshape(1, 1, cmid)
        zcol = jnp.zeros((TH + 2, 1, cmid), jnp.float32)
        hp_ref[:, 0:1, :] = zcol                               # left zero column (pad=1)
        hp_ref[:, W + 1:W + 2, :] = zcol                       # right zero column
        top = _leaky(top_ref[...].reshape(1, W, cmid) * s1 + b1)
        bot = _leaky(bot_ref[...].reshape(1, W, cmid) * s1 + b1)
        hp_ref[0:1, 1:W + 1, :] = jnp.where(j == 0, jnp.zeros_like(top), top)
        hp_ref[TH + 1:TH + 2, 1:W + 1, :] = jnp.where(j == nH - 1, jnp.zeros_like(bot), bot)
        hp_ref[1:TH + 1, 1:W + 1, :] = _leaky(mid_ref[...] * s1 + b1)

    acc = jnp.zeros((TH * W, tcout), jnp.float32)
    if pack_taps:
        # Cmid < 128: pack the 3 column taps into K = 3*Cmid to fill MXU depth (3 matmuls).
        for di in range(3):
            rows = hp_ref[di:di + TH, :, :]                    # [TH, W+2, Cmid]
            taps = jnp.concatenate(
                [rows[:, 0:W, :], rows[:, 1:W + 1, :], rows[:, 2:W + 2, :]], axis=-1)
            acc = acc + jnp.dot(taps.reshape(TH * W, 3 * cmid), w_ref[di],
                                preferred_element_type=jnp.float32)
    else:
        # Cmid >= 128: MXU already well fed at K = Cmid; 9 shifted matmuls, no tap copies.
        for di in range(3):
            for dj in range(3):
                win = hp_ref[di:di + TH, dj:dj + W, :]         # [TH, W, Cmid]
                acc = acc + jnp.dot(win.reshape(TH * W, cmid),
                                    w_ref[di, dj * cmid:(dj + 1) * cmid, :],
                                    preferred_element_type=jnp.float32)

    y2_ref[...] = acc.reshape(TH, W, tcout)
    st_ref[0:1, :] = jnp.sum(acc, axis=0, keepdims=True)
    st_ref[1:2, :] = jnp.sum(acc * acc, axis=0, keepdims=True)


def bn_leaky_res_kernel(y_ref, s_ref, b_ref, r_ref, o_ref):
    o_ref[...] = _leaky(y_ref[...] * s_ref[...] + b_ref[...]) + r_ref[...]


def bn_leaky_kernel(y_ref, s_ref, b_ref, o_ref):
    o_ref[...] = _leaky(y_ref[...] * s_ref[...] + b_ref[...])


# ----------------------------------------------------------------------------- pallas wrappers
def conv1x1_stats(x, w1, budget):
    m, cin = x.shape
    cmid = w1.shape[1]
    tm = _pick_row_tile(m, 4 * 2 * (cin + cmid), budget)
    nt = m // tm
    return pl.pallas_call(
        conv1x1_stats_kernel,
        out_shape=(jax.ShapeDtypeStruct((m, cmid), jnp.float32),
                   jax.ShapeDtypeStruct((nt, 8, cmid), jnp.float32)),
        grid=(nt,),
        in_specs=[pl.BlockSpec((tm, cin), lambda i: (i, 0)),
                  pl.BlockSpec((cin, cmid), lambda i: (0, 0))],
        out_specs=(pl.BlockSpec((tm, cmid), lambda i: (i, 0)),
                   pl.BlockSpec((None, 8, cmid), lambda i: (i, 0, 0))),
        compiler_params=_cparams(("parallel",), budget),
    )(x, w1)


def fused_bn_conv1x1(y2, s2, b2, residual, w1, budget):
    m, c = y2.shape
    cmid = w1.shape[1]
    tm = _pick_row_tile(m, 4 * 2 * (3 * c + cmid), budget)
    nt = m // tm
    row_spec = pl.BlockSpec((tm, c), lambda i: (i, 0))
    ch_spec = pl.BlockSpec((1, c), lambda i: (0, 0))
    w_spec = pl.BlockSpec((c, cmid), lambda i: (0, 0))
    out_shape = (jax.ShapeDtypeStruct((m, c), jnp.float32),
                 jax.ShapeDtypeStruct((m, cmid), jnp.float32),
                 jax.ShapeDtypeStruct((nt, 8, cmid), jnp.float32))
    out_specs = (row_spec,
                 pl.BlockSpec((tm, cmid), lambda i: (i, 0)),
                 pl.BlockSpec((None, 8, cmid), lambda i: (i, 0, 0)))
    if residual is None:        # shortcut disabled: dedicated kernel, no zero tensor
        return pl.pallas_call(
            fused_bn_conv1x1_kernel, out_shape=out_shape, grid=(nt,),
            in_specs=[row_spec, ch_spec, ch_spec, w_spec], out_specs=out_specs,
            compiler_params=_cparams(("parallel",), budget),
        )(y2, s2, b2, w1)
    return pl.pallas_call(
        fused_bn_res_conv1x1_kernel, out_shape=out_shape, grid=(nt,),
        in_specs=[row_spec, ch_spec, ch_spec, row_spec, w_spec], out_specs=out_specs,
        compiler_params=_cparams(("parallel",), budget),
    )(y2, s2, b2, residual, w1)


def conv3x3_stats(y1_flat, w2, s1, b1, n, h, w, budget):
    cmid = y1_flat.shape[1]
    cout = w2.shape[3]
    y1 = y1_flat.reshape(n, h, w, cmid)
    tcout = _pick_cout_tile(cout, cmid, budget)
    pack_taps = cmid < 128
    th = _pick_h_tile(h, w, cmid, tcout, budget)
    nH = h // th
    nC = cout // tcout
    w2p = w2.reshape(3, 3 * cmid, cout)      # pack the 3 column taps into K per row tap
    kern = functools.partial(conv3x3_stats_kernel, TH=th, W=w, cmid=cmid,
                             tcout=tcout, pack_taps=pack_taps)
    y2, st = pl.pallas_call(
        kern,
        out_shape=(jax.ShapeDtypeStruct((n, h, w, cout), jnp.float32),
                   jax.ShapeDtypeStruct((n, nH, 8, cout), jnp.float32)),
        grid=(n, nH, nC),
        in_specs=[
            # top halo row (edge-clamped; zeroed in-kernel at j == 0)
            pl.BlockSpec((None, None, w, cmid),
                         lambda i, j, c: (i, jnp.maximum(j * th - 1, 0), 0, 0)),
            # main row tile
            pl.BlockSpec((None, th, w, cmid), lambda i, j, c: (i, j, 0, 0)),
            # bottom halo row (edge-clamped; zeroed in-kernel at j == nH-1)
            pl.BlockSpec((None, None, w, cmid),
                         lambda i, j, c: (i, jnp.minimum((j + 1) * th, h - 1), 0, 0)),
            # packed 3x3 weights, tiled over Cout
            pl.BlockSpec((3, 3 * cmid, tcout), lambda i, j, c: (0, 0, c)),
            pl.BlockSpec((1, cmid), lambda i, j, c: (0, 0)),
            pl.BlockSpec((1, cmid), lambda i, j, c: (0, 0)),
        ],
        out_specs=(
            pl.BlockSpec((None, th, w, tcout), lambda i, j, c: (i, j, 0, c)),
            pl.BlockSpec((None, None, 8, tcout), lambda i, j, c: (i, j, 0, c)),
        ),
        scratch_shapes=[pltpu.VMEM((th + 2, w + 2, cmid), jnp.float32)],
        compiler_params=_cparams(("parallel", "parallel", "arbitrary"), budget),
    )(y1, y1, y1, w2p, s1, b1)
    return y2.reshape(n * h * w, cout), st


def bn_leaky_residual(y2, s2, b2, residual, budget):
    m, c = y2.shape
    tm = _pick_row_tile(m, 4 * 2 * 3 * c, budget)
    nt = m // tm
    row_spec = pl.BlockSpec((tm, c), lambda i: (i, 0))
    ch_spec = pl.BlockSpec((1, c), lambda i: (0, 0))
    if residual is None:
        return pl.pallas_call(
            bn_leaky_kernel, out_shape=jax.ShapeDtypeStruct((m, c), jnp.float32),
            grid=(nt,), in_specs=[row_spec, ch_spec, ch_spec], out_specs=row_spec,
            compiler_params=_cparams(("parallel",), budget),
        )(y2, s2, b2)
    return pl.pallas_call(
        bn_leaky_res_kernel, out_shape=jax.ShapeDtypeStruct((m, c), jnp.float32),
        grid=(nt,), in_specs=[row_spec, ch_spec, ch_spec, row_spec], out_specs=row_spec,
        compiler_params=_cparams(("parallel",), budget),
    )(y2, s2, b2, residual)


# ----------------------------------------------------------------------------- BN folding (tiny XLA glue)
def _fold_bn(stats, gamma, beta, count):
    # stats: [..., 8, C] with rows 0 = sum, 1 = sum_sq (rows 2..7 are padding, never read)
    st = stats.reshape(-1, stats.shape[-2], stats.shape[-1])
    s = jnp.sum(st[:, 0, :], axis=0)
    ss = jnp.sum(st[:, 1, :], axis=0)
    mean = s / count
    var = jnp.maximum(ss / count - mean * mean, 0.0)          # biased batch variance
    scale = gamma.reshape(-1) * jax.lax.rsqrt(var + EPS)
    bias = beta.reshape(-1) - mean * scale
    return scale.reshape(1, -1), bias.reshape(1, -1)


# ----------------------------------------------------------------------------- module-level forward
def init_resblock_params(key, ch, nblocks=1):
    """Deterministic synthetic params. w1: [Cin, Cmid] (1x1), w2: [3,3,Cmid,Cout] (HWIO)."""
    params = []
    cmid = ch // 2
    for _ in range(nblocks):
        key, k1, k2, k3, k4, k5, k6 = jax.random.split(key, 7)
        params.append(dict(
            w1=0.1 * jax.random.normal(k1, (ch, cmid), jnp.float32),
            g1=1.0 + 0.1 * jax.random.normal(k2, (1, cmid), jnp.float32),
            b1=0.1 * jax.random.normal(k3, (1, cmid), jnp.float32),
            w2=0.1 * jax.random.normal(k4, (3, 3, cmid, ch), jnp.float32),
            g2=1.0 + 0.1 * jax.random.normal(k5, (1, ch), jnp.float32),
            b2=0.1 * jax.random.normal(k6, (1, ch), jnp.float32),
        ))
    return params


def resblock_forward(x_nchw, params, shortcut=True):
    n, c, h, w = x_nchw.shape
    m = n * h * w
    budget = _vmem_budget()
    # NCHW (PyTorch) -> NHWC -> flattened rows (channels on TPU lanes)
    x = jnp.transpose(x_nchw, (0, 2, 3, 1)).reshape(m, c)
    prev = None                                   # pending (y2, s2, b2) of the previous block
    for p in params:
        if prev is None:
            y1, st1 = conv1x1_stats(x, p["w1"], budget)                       # call A
        else:
            y2p, s2p, b2p = prev                                              # call A' (fused C+A)
            x, y1, st1 = fused_bn_conv1x1(y2p, s2p, b2p,
                                          x if shortcut else None, p["w1"], budget)
        s1, b1 = _fold_bn(st1, p["g1"], p["b1"], m)
        y2, st2 = conv3x3_stats(y1, p["w2"], s1, b1, n, h, w, budget)         # call B
        s2, b2 = _fold_bn(st2, p["g2"], p["b2"], m)
        prev = (y2, s2, b2)
    y2, s2, b2 = prev
    x = bn_leaky_residual(y2, s2, b2, x if shortcut else None, budget)        # final call C
    return jnp.transpose(x.reshape(n, h, w, c), (0, 3, 1, 2))                 # back to NCHW


if __name__ == "__main__":
    key = jax.random.PRNGKey(0)
    kx, kp = jax.random.split(key)

    N, CH, H, W = 2, 4, 16, 16          # small shapes; ch must be even (ch//2 hidden)
    NBLOCKS = 2
    x = jax.random.normal(kx, (N, CH, H, W), jnp.float32)
    params = init_resblock_params(kp, CH, nblocks=NBLOCKS)

    out = resblock_forward(x, params, shortcut=True)
    out = jax.block_until_ready(out)

    assert out.shape == (N, CH, H, W)
    assert bool(jnp.isfinite(out).all())
    print("KERNEL_OK")
</pallas_src>

<mosaic_0001>
module attributes {stable_mosaic.version = 11 : i64} {
  func.func @conv1x1_stats_kernel(%arg0: i32, %arg1: memref<512x4xf32, #tpu.memory_space<vmem>>, %arg2: memref<4x2xf32, #tpu.memory_space<vmem>>, %arg3: memref<512x2xf32, #tpu.memory_space<vmem>>, %arg4: memref<1x8x2xf32, #tpu.memory_space<vmem>>) attributes {dimension_semantics = [#tpu.dimension_semantics<parallel>], iteration_bounds = array<i64: 1>, scalar_prefetch = 0 : i64, scratch_operands = 0 : i64, tpu.core_type = #tpu.core_type<tc>, window_params = [{transform_indices = @transform_0, window_bounds = array<i64: 512, 4>}, {pipeline_mode = #tpu.pipeline_mode<synchronous>, transform_indices = @transform_1, window_bounds = array<i64: 4, 2>}, {transform_indices = @transform_2, window_bounds = array<i64: 512, 2>}, {transform_indices = @transform_3, window_bounds = array<i64: 1, 8, 2>}]} {
    %c0 = arith.constant 0 : index
    %c0_0 = arith.constant 0 : index
    %0 = vector.load %arg1[%c0, %c0_0] : memref<512x4xf32, #tpu.memory_space<vmem>>, vector<512x4xf32>
    %c0_1 = arith.constant 0 : index
    %c0_2 = arith.constant 0 : index
    %1 = vector.load %arg2[%c0_1, %c0_2] : memref<4x2xf32, #tpu.memory_space<vmem>>, vector<4x2xf32>
    %cst = arith.constant dense<0.000000e+00> : vector<512x2xf32>
    %2 = tpu.matmul %0, %1, %cst {dimension_numbers = #tpu.dot_dimension_numbers<[1], [0], [0], [1], [0, 0, 1, 1], [], []>} : vector<512x4xf32>, vector<4x2xf32>, vector<512x2xf32> -> vector<512x2xf32>
    %c0_3 = arith.constant 0 : index
    %c0_4 = arith.constant 0 : index
    %3 = vector.load %arg3[%c0_3, %c0_4] : memref<512x2xf32, #tpu.memory_space<vmem>>, vector<512x2xf32>
    tpu.vector_store %arg3[%c0_3, %c0_4], %2 {strides = array<i32>} : memref<512x2xf32, #tpu.memory_space<vmem>>, vector<512x2xf32>,
    %cst_5 = arith.constant dense<0.000000e+00> : vector<2xf32>
    %4 = vector.multi_reduction <add>, %2, %cst_5 [0] : vector<512x2xf32> to vector<2xf32>
    %5 = vector.shape_cast %4 : vector<2xf32> to vector<1x2xf32>
    %c0_6 = arith.constant 0 : index
    %c0_7 = arith.constant 0 : index
    %c0_8 = arith.constant 0 : index
    %6 = vector.load %arg4[%c0_6, %c0_7, %c0_8] : memref<1x8x2xf32, #tpu.memory_space<vmem>>, vector<1x1x2xf32>
    %7 = vector.shape_cast %6 : vector<1x1x2xf32> to vector<1x2xf32>
    %8 = vector.shape_cast %5 : vector<1x2xf32> to vector<1x1x2xf32>
    tpu.vector_store %arg4[%c0_6, %c0_7, %c0_8], %8 {strides = array<i32>} : memref<1x8x2xf32, #tpu.memory_space<vmem>>, vector<1x1x2xf32>,
    %9 = arith.mulf %2, %2 : vector<512x2xf32>
    %cst_9 = arith.constant dense<0.000000e+00> : vector<2xf32>
    %10 = vector.multi_reduction <add>, %9, %cst_9 [0] : vector<512x2xf32> to vector<2xf32>
    %11 = vector.shape_cast %10 : vector<2xf32> to vector<1x2xf32>
    %c0_10 = arith.constant 0 : index
    %c1 = arith.constant 1 : index
    %c0_11 = arith.constant 0 : index
    %12 = vector.load %arg4[%c0_10, %c1, %c0_11] : memref<1x8x2xf32, #tpu.memory_space<vmem>>, vector<1x1x2xf32>
    %13 = vector.shape_cast %12 : vector<1x1x2xf32> to vector<1x2xf32>
    %14 = vector.shape_cast %11 : vector<1x2xf32> to vector<1x1x2xf32>
    tpu.vector_store %arg4[%c0_10, %c1, %c0_11], %14 {strides = array<i32>} : memref<1x8x2xf32, #tpu.memory_space<vmem>>, vector<1x1x2xf32>,
    return
  }
  func.func @transform_0(%arg0: i32) -> (i32, i32) {
    %c0_i32 = arith.constant 0 : i32
    %c0_i32_0 = arith.constant 0 : i32
    return %arg0, %c0_i32 : i32, i32
  }
  func.func @transform_1(%arg0: i32) -> (i32, i32) {
    %c0_i32 = arith.constant 0 : i32
    %c0_i32_0 = arith.constant 0 : i32
    %c0_i32_1 = arith.constant 0 : i32
    return %c0_i32, %c0_i32_0 : i32, i32
  }
  func.func @transform_2(%arg0: i32) -> (i32, i32) {
    %c0_i32 = arith.constant 0 : i32
    %c0_i32_0 = arith.constant 0 : i32
    return %arg0, %c0_i32 : i32, i32
  }
  func.func @transform_3(%arg0: i32) -> (i32, i32, i32) {
    %c0_i32 = arith.constant 0 : i32
    %c0_i32_0 = arith.constant 0 : i32
    %c0_i32_1 = arith.constant 0 : i32
    return %arg0, %c0_i32, %c0_i32_0 : i32, i32, i32
  }
}

</mosaic_0001>

<llo_original>
// kernel: tpu_custom_call.1
$region0: #{tpu_custom_call.1}
  #allocation0 [shape = 'u32[]', space=smem, size = 0x4, offset = 0x4, fixed_abs, tag = 'smem constant byte address 0x4 - core index']
  #allocation1 [shape = 'u32[72,128]{1,0:T(1,128)}', space=vmem, size = 0x9000, scoped, tag = 'internal scratch']
  %s0 = inlined_call_operand.vmem [shape: f32[512,4], index: 0, kind: input, shape index: {}]
  %s1 = inlined_call_operand.vmem [shape: f32[4,2], index: 1, kind: input, shape index: {}]
  %s2 = inlined_call_operand.vmem [shape: f32[512,2], index: 2, kind: output, shape index: {0}]
  %s3 = inlined_call_operand.vmem [shape: f32[1,8,2], index: 3, kind: output, shape index: {1}]
  %4 = xla_tuple %s2, %s3
  %s5 = sld [smem:[#allocation0]]
  $region26: #{tpu_custom_call.1} parent=0
    _
  %s7 = ssub.s32 1, %s5
  %s8 = scalar_select 0, %s7, %s5
  // Predicated region
  $region2: #{tpu_custom_call.1} parent=0 // pred_check
    _
  $region3: #{tpu_custom_call.1} parent=0 // pred_check_branch
    %10 = sbr.rel (0) target = $region5
  $region4: #{tpu_custom_call.1} parent=0 // pred_region
    _
  $region5: #{tpu_custom_call.1} parent=0 // pred_fallthru
    _
  // Predicated region
  $region6: #{tpu_custom_call.1} parent=0 // pred_check
    _
  $region7: #{tpu_custom_call.1} parent=0 // pred_check_branch
    %12 = sbr.rel (0) target = $region9
  $region8: #{tpu_custom_call.1} parent=0 // pred_region
    _
  $region9: #{tpu_custom_call.1} parent=0 // pred_fallthru
    _
  %v13 = vld [vmem:[%s0] sm:$0xff]
  %v14 = vld [vmem:[%s0 + $0x8] sm:$0xff]
  %v15 = vld [vmem:[%s0 + $0x10] sm:$0xff]
  %v16 = vld [vmem:[%s0 + $0x18] sm:$0xff]
  %v17 = vld [vmem:[%s0 + $0x20] sm:$0xff]
  %v18 = vld [vmem:[%s0 + $0x28] sm:$0xff]
  %v19 = vld [vmem:[%s0 + $0x30] sm:$0xff]
  %v20 = vld [vmem:[%s0 + $0x38] sm:$0xff]
  %v21 = vld [vmem:[%s0 + $0x40] sm:$0xff]
  %v22 = vld [vmem:[%s0 + $0x48] sm:$0xff]
  %v23 = vld [vmem:[%s0 + $0x50] sm:$0xff]
  %v24 = vld [vmem:[%s0 + $0x58] sm:$0xff]
  %v25 = vld [vmem:[%s0 + $0x60] sm:$0xff]
  %v26 = vld [vmem:[%s0 + $0x68] sm:$0xff]
  %v27 = vld [vmem:[%s0 + $0x70] sm:$0xff]
  %v28 = vld [vmem:[%s0 + $0x78] sm:$0xff]
  %v29 = vld [vmem:[%s0 + $0x80] sm:$0xff]
  %v30 = vld [vmem:[%s0 + $0x88] sm:$0xff]
  %v31 = vld [vmem:[%s0 + $0x90] sm:$0xff]
  %v32 = vld [vmem:[%s0 + $0x98] sm:$0xff]
  %v33 = vld [vmem:[%s0 + $0xa0] sm:$0xff]
  %v34 = vld [vmem:[%s0 + $0xa8] sm:$0xff]
  %v35 = vld [vmem:[%s0 + $0xb0] sm:$0xff]
  %v36 = vld [vmem:[%s0 + $0xb8] sm:$0xff]
  %v37 = vld [vmem:[%s0 + $0xc0] sm:$0xff]
  %v38 = vld [vmem:[%s0 + $0xc8] sm:$0xff]
  %v39 = vld [vmem:[%s0 + $0xd0] sm:$0xff]
  %v40 = vld [vmem:[%s0 + $0xd8] sm:$0xff]
  %v41 = vld [vmem:[%s0 + $0xe0] sm:$0xff]
  %v42 = vld [vmem:[%s0 + $0xe8] sm:$0xff]
  %v43 = vld [vmem:[%s0 + $0xf0] sm:$0xff]
  %v44 = vld [vmem:[%s0 + $0xf8] sm:$0xff]
  %v45 = vld [vmem:[%s0 + $0x100] sm:$0xff]
  %v46 = vld [vmem:[%s0 + $0x108] sm:$0xff]
  %v47 = vld [vmem:[%s0 + $0x110] sm:$0xff]
  %v48 = vld [vmem:[%s0 + $0x118] sm:$0xff]
  %v49 = vld [vmem:[%s0 + $0x120] sm:$0xff]
  %v50 = vld [vmem:[%s0 + $0x128] sm:$0xff]
  %v51 = vld [vmem:[%s0 + $0x130] sm:$0xff]
  %v52 = vld [vmem:[%s0 + $0x138] sm:$0xff]
  %v53 = vld [vmem:[%s0 + $0x140] sm:$0xff]
  %v54 = vld [vmem:[%s0 + $0x148] sm:$0xff]
  %v55 = vld [vmem:[%s0 + $0x150] sm:$0xff]
  %v56 = vld [vmem:[%s0 + $0x158] sm:$0xff]
  %v57 = vld [vmem:[%s0 + $0x160] sm:$0xff]
  %v58 = vld [vmem:[%s0 + $0x168] sm:$0xff]
  %v59 = vld [vmem:[%s0 + $0x170] sm:$0xff]
  %v60 = vld [vmem:[%s0 + $0x178] sm:$0xff]
  %v61 = vld [vmem:[%s0 + $0x180] sm:$0xff]
  %v62 = vld [vmem:[%s0 + $0x188] sm:$0xff]
  %v63 = vld [vmem:[%s0 + $0x190] sm:$0xff]
  %v64 = vld [vmem:[%s0 + $0x198] sm:$0xff]
  %v65 = vld [vmem:[%s0 + $0x1a0] sm:$0xff]
  %v66 = vld [vmem:[%s0 + $0x1a8] sm:$0xff]
  %v67 = vld [vmem:[%s0 + $0x1b0] sm:$0xff]
  %v68 = vld [vmem:[%s0 + $0x1b8] sm:$0xff]
  %v69 = vld [vmem:[%s0 + $0x1c0] sm:$0xff]
  %v70 = vld [vmem:[%s0 + $0x1c8] sm:$0xff]
  %v71 = vld [vmem:[%s0 + $0x1d0] sm:$0xff]
  %v72 = vld [vmem:[%s0 + $0x1d8] sm:$0xff]
  %v73 = vld [vmem:[%s0 + $0x1e0] sm:$0xff]
  %v74 = vld [vmem:[%s0 + $0x1e8] sm:$0xff]
  %v75 = vld [vmem:[%s0 + $0x1f0] sm:$0xff]
  %v76 = vld [vmem:[%s0 + $0x1f8] sm:$0xff]
  %v77 = vld [vmem:[%s1] sm:$0xf]
  %vm78 = vcmask 31744
  %v80 = vsel %vm78, %v13, 0
  %v83 = vsel %vm78, %v14, 0
  %v86 = vsel %vm78, %v15, 0
  %v89 = vsel %vm78, %v16, 0
  %v92 = vsel %vm78, %v17, 0
  %v95 = vsel %vm78, %v18, 0
  %v98 = vsel %vm78, %v19, 0
  %v101 = vsel %vm78, %v20, 0
  %v104 = vsel %vm78, %v21, 0
  %v107 = vsel %vm78, %v22, 0
  %v110 = vsel %vm78, %v23, 0
  %v113 = vsel %vm78, %v24, 0
  %v116 = vsel %vm78, %v25, 0
  %v119 = vsel %vm78, %v26, 0
  %v122 = vsel %vm78, %v27, 0
  %v125 = vsel %vm78, %v28, 0
  %v128 = vsel %vm78, %v29, 0
  %v131 = vsel %vm78, %v30, 0
  %v134 = vsel %vm78, %v31, 0
  %v137 = vsel %vm78, %v32, 0
  %v140 = vsel %vm78, %v33, 0
  %v143 = vsel %vm78, %v34, 0
  %v146 = vsel %vm78, %v35, 0
  %v149 = vsel %vm78, %v36, 0
  %v152 = vsel %vm78, %v37, 0
  %v155 = vsel %vm78, %v38, 0
  %v158 = vsel %vm78, %v39, 0
  %v161 = vsel %vm78, %v40, 0
  %v164 = vsel %vm78, %v41, 0
  %v167 = vsel %vm78, %v42, 0
  %v170 = vsel %vm78, %v43, 0
  %v173 = vsel %vm78, %v44, 0
  %v176 = vsel %vm78, %v45, 0
  %v179 = vsel %vm78, %v46, 0
  %v182 = vsel %vm78, %v47, 0
  %v185 = vsel %vm78, %v48, 0
  %v188 = vsel %vm78, %v49, 0
  %v191 = vsel %vm78, %v50, 0
  %v194 = vsel %vm78, %v51, 0
  %v197 = vsel %vm78, %v52, 0
  %v200 = vsel %vm78, %v53, 0
  %v203 = vsel %vm78, %v54, 0
  %v206 = vsel %vm78, %v55, 0
  %v209 = vsel %vm78, %v56, 0
  %v212 = vsel %vm78, %v57, 0
  %v215 = vsel %vm78, %v58, 0
  %v218 = vsel %vm78, %v59, 0
  %v221 = vsel %vm78, %v60, 0
  %v224 = vsel %vm78, %v61, 0
  %v227 = vsel %vm78, %v62, 0
  %v230 = vsel %vm78, %v63, 0
  %v233 = vsel %vm78, %v64, 0
  %v236 = vsel %vm78, %v65, 0
  %v239 = vsel %vm78, %v66, 0
  %v242 = vsel %vm78, %v67, 0
  %v245 = vsel %vm78, %v68, 0
  %v248 = vsel %vm78, %v69, 0
  %v251 = vsel %vm78, %v70, 0
  %v254 = vsel %vm78, %v71, 0
  %v257 = vsel %vm78, %v72, 0
  %v260 = vsel %vm78, %v73, 0
  %v263 = vsel %vm78, %v74, 0
  %v266 = vsel %vm78, %v75, 0
  %v269 = vsel %vm78, %v76, 0
  %vm271 = vcmask 1043456
  %v273 = vsel %vm271, %v77, 0
  %275 = vmatpush.msra.mxu0 0.0
  %276 = vmatpush.msra.mxu0 0.0
  %277 = vmatpush.msra.mxu0 0.0
  %278 = vmatpush.msra.mxu0 0.0
  %279 = vmatpush.msra.mxu0 0.0
  %280 = vmatpush.msra.mxu0 0.0
  %281 = vmatpush.msra.mxu0 0.0
  %282 = vmatpush.msra.mxu0 0.0
  %283 = vmatpush.msra.mxu0 0.0
  %284 = vmatpush.msra.mxu0 0.0
  %285 = vmatpush.msra.mxu0 0.0
  %286 = vmatpush.msra.mxu0 0.0
  %287 = vmatpush.msra.mxu0 0.0
  %288 = vmatpush.msra.mxu0 0.0
  %289 = vmatpush.msra.mxu0 0.0
  %290 = vmatpush.msra.mxu0 %v273
  %291 = vmatmul.f32.gmra.mxu0 %v80
  %v292 = vpop.f32.mrf.mxu0
  %v293 = vadd.f32 0.0, %v292
  %294 = vmatmul.f32.gmra.mxu0 %v83
  %v295 = vpop.f32.mrf.mxu0
  %v296 = vadd.f32 0.0, %v295
  %297 = vmatmul.f32.gmra.mxu0 %v86
  %v298 = vpop.f32.mrf.mxu0
  %v299 = vadd.f32 0.0, %v298
  %300 = vmatmul.f32.gmra.mxu0 %v89
  %v301 = vpop.f32.mrf.mxu0
  %v302 = vadd.f32 0.0, %v301
  %303 = vmatmul.f32.gmra.mxu0 %v92
  %v304 = vpop.f32.mrf.mxu0
  %v305 = vadd.f32 0.0, %v304
  %306 = vmatmul.f32.gmra.mxu0 %v95
  %v307 = vpop.f32.mrf.mxu0
  %v308 = vadd.f32 0.0, %v307
  %309 = vmatmul.f32.gmra.mxu0 %v98
  %v310 = vpop.f32.mrf.mxu0
  %v311 = vadd.f32 0.0, %v310
  %312 = vmatmul.f32.gmra.mxu0 %v101
  %v313 = vpop.f32.mrf.mxu0
  %v314 = vadd.f32 0.0, %v313
  %315 = vmatmul.f32.gmra.mxu0 %v104
  %v316 = vpop.f32.mrf.mxu0
  %v317 = vadd.f32 0.0, %v316
  %318 = vmatmul.f32.gmra.mxu0 %v107
  %v319 = vpop.f32.mrf.mxu0
  %v320 = vadd.f32 0.0, %v319
  %321 = vmatmul.f32.gmra.mxu0 %v110
  %v322 = vpop.f32.mrf.mxu0
  %v323 = vadd.f32 0.0, %v322
  %324 = vmatmul.f32.gmra.mxu0 %v113
  %v325 = vpop.f32.mrf.mxu0
  %v326 = vadd.f32 0.0, %v325
  %327 = vmatmul.f32.gmra.mxu0 %v116
  %v328 = vpop.f32.mrf.mxu0
  %v329 = vadd.f32 0.0, %v328
  %330 = vmatmul.f32.gmra.mxu0 %v119
  %v331 = vpop.f32.mrf.mxu0
  %v332 = vadd.f32 0.0, %v331
  %333 = vmatmul.f32.gmra.mxu0 %v122
  %v334 = vpop.f32.mrf.mxu0
  %v335 = vadd.f32 0.0, %v334
  %336 = vmatmul.f32.gmra.mxu0 %v125
  %v337 = vpop.f32.mrf.mxu0
  %v338 = vadd.f32 0.0, %v337
  %339 = vmatmul.f32.gmra.mxu0 %v128
  %v340 = vpop.f32.mrf.mxu0
  %v341 = vadd.f32 0.0, %v340
  %342 = vmatmul.f32.gmra.mxu0 %v131
  %v343 = vpop.f32.mrf.mxu0
  %v344 = vadd.f32 0.0, %v343
  %345 = vmatmul.f32.gmra.mxu0 %v134
  %v346 = vpop.f32.mrf.mxu0
  %v347 = vadd.f32 0.0, %v346
  %348 = vmatmul.f32.gmra.mxu0 %v137
  %v349 = vpop.f32.mrf.mxu0
  %v350 = vadd.f32 0.0, %v349
  %351 = vmatmul.f32.gmra.mxu0 %v140
  %v352 = vpop.f32.mrf.mxu0
  %v353 = vadd.f32 0.0, %v352
  %354 = vmatmul.f32.gmra.mxu0 %v143
  %v355 = vpop.f32.mrf.mxu0
  %v356 = vadd.f32 0.0, %v355
  %357 = vmatmul.f32.gmra.mxu0 %v146
  %v358 = vpop.f32.mrf.mxu0
  %v359 = vadd.f32 0.0, %v358
  %360 = vmatmul.f32.gmra.mxu0 %v149
  %v361 = vpop.f32.mrf.mxu0
  %v362 = vadd.f32 0.0, %v361
  %363 = vmatmul.f32.gmra.mxu0 %v152
  %v364 = vpop.f32.mrf.mxu0
  %v365 = vadd.f32 0.0, %v364
  %366 = vmatmul.f32.gmra.mxu0 %v155
  %v367 = vpop.f32.mrf.mxu0
  %v368 = vadd.f32 0.0, %v367
  %369 = vmatmul.f32.gmra.mxu0 %v158
  %v370 = vpop.f32.mrf.mxu0
  %v371 = vadd.f32 0.0, %v370
  %372 = vmatmul.f32.gmra.mxu0 %v161
  %v373 = vpop.f32.mrf.mxu0
  %v374 = vadd.f32 0.0, %v373
  %375 = vmatmul.f32.gmra.mxu0 %v164
  %v376 = vpop.f32.mrf.mxu0
  %v377 = vadd.f32 0.0, %v376
  %378 = vmatmul.f32.gmra.mxu0 %v167
  %v379 = vpop.f32.mrf.mxu0
  %v380 = vadd.f32 0.0, %v379
  %381 = vmatmul.f32.gmra.mxu0 %v170
  %v382 = vpop.f32.mrf.mxu0
  %v383 = vadd.f32 0.0, %v382
  %384 = vmatmul.f32.gmra.mxu0 %v173
  %v385 = vpop.f32.mrf.mxu0
  %v386 = vadd.f32 0.0, %v385
  %387 = vmatmul.f32.gmra.mxu0 %v176
  %v388 = vpop.f32.mrf.mxu0
  %v389 = vadd.f32 0.0, %v388
  %390 = vmatmul.f32.gmra.mxu0 %v179
  %v391 = vpop.f32.mrf.mxu0
  %v392 = vadd.f32 0.0, %v391
  %393 = vmatmul.f32.gmra.mxu0 %v182
  %v394 = vpop.f32.mrf.mxu0
  %v395 = vadd.f32 0.0, %v394
  %396 = vmatmul.f32.gmra.mxu0 %v185
  %v397 = vpop.f32.mrf.mxu0
  %v398 = vadd.f32 0.0, %v397
  %399 = vmatmul.f32.gmra.mxu0 %v188
  %v400 = vpop.f32.mrf.mxu0
  %v401 = vadd.f32 0.0, %v400
  %402 = vmatmul.f32.gmra.mxu0 %v191
  %v403 = vpop.f32.mrf.mxu0
  %v404 = vadd.f32 0.0, %v403
  %405 = vmatmul.f32.gmra.mxu0 %v194
  %v406 = vpop.f32.mrf.mxu0
  %v407 = vadd.f32 0.0, %v406
  %408 = vmatmul.f32.gmra.mxu0 %v197
  %v409 = vpop.f32.mrf.mxu0
  %v410 = vadd.f32 0.0, %v409
  %411 = vmatmul.f32.gmra.mxu0 %v200
  %v412 = vpop.f32.mrf.mxu0
  %v413 = vadd.f32 0.0, %v412
  %414 = vmatmul.f32.gmra.mxu0 %v203
  %v415 = vpop.f32.mrf.mxu0
  %v416 = vadd.f32 0.0, %v415
  %417 = vmatmul.f32.gmra.mxu0 %v206
  %v418 = vpop.f32.mrf.mxu0
  %v419 = vadd.f32 0.0, %v418
  %420 = vmatmul.f32.gmra.mxu0 %v209
  %v421 = vpop.f32.mrf.mxu0
  %v422 = vadd.f32 0.0, %v421
  %423 = vmatmul.f32.gmra.mxu0 %v212
  %v424 = vpop.f32.mrf.mxu0
  %v425 = vadd.f32 0.0, %v424
  %426 = vmatmul.f32.gmra.mxu0 %v215
  %v427 = vpop.f32.mrf.mxu0
  %v428 = vadd.f32 0.0, %v427
  %429 = vmatmul.f32.gmra.mxu0 %v218
  %v430 = vpop.f32.mrf.mxu0
  %v431 = vadd.f32 0.0, %v430
  %432 = vmatmul.f32.gmra.mxu0 %v221
  %v433 = vpop.f32.mrf.mxu0
  %v434 = vadd.f32 0.0, %v433
  %435 = vmatmul.f32.gmra.mxu0 %v224
  %v436 = vpop.f32.mrf.mxu0
  %v437 = vadd.f32 0.0, %v436
  %438 = vmatmul.f32.gmra.mxu0 %v227
  %v439 = vpop.f32.mrf.mxu0
  %v440 = vadd.f32 0.0, %v439
  %441 = vmatmul.f32.gmra.mxu0 %v230
  %v442 = vpop.f32.mrf.mxu0
  %v443 = vadd.f32 0.0, %v442
  %444 = vmatmul.f32.gmra.mxu0 %v233
  %v445 = vpop.f32.mrf.mxu0
  %v446 = vadd.f32 0.0, %v445
  %447 = vmatmul.f32.gmra.mxu0 %v236
  %v448 = vpop.f32.mrf.mxu0
  %v449 = vadd.f32 0.0, %v448
  %450 = vmatmul.f32.gmra.mxu0 %v239
  %v451 = vpop.f32.mrf.mxu0
  %v452 = vadd.f32 0.0, %v451
  %453 = vmatmul.f32.gmra.mxu0 %v242
  %v454 = vpop.f32.mrf.mxu0
  %v455 = vadd.f32 0.0, %v454
  %456 = vmatmul.f32.gmra.mxu0 %v245
  %v457 = vpop.f32.mrf.mxu0
  %v458 = vadd.f32 0.0, %v457
  %459 = vmatmul.f32.gmra.mxu0 %v248
  %v460 = vpop.f32.mrf.mxu0
  %v461 = vadd.f32 0.0, %v460
  %462 = vmatmul.f32.gmra.mxu0 %v251
  %v463 = vpop.f32.mrf.mxu0
  %v464 = vadd.f32 0.0, %v463
  %465 = vmatmul.f32.gmra.mxu0 %v254
  %v466 = vpop.f32.mrf.mxu0
  %v467 = vadd.f32 0.0, %v466
  %468 = vmatmul.f32.gmra.mxu0 %v257
  %v469 = vpop.f32.mrf.mxu0
  %v470 = vadd.f32 0.0, %v469
  %471 = vmatmul.f32.gmra.mxu0 %v260
  %v472 = vpop.f32.mrf.mxu0
  %v473 = vadd.f32 0.0, %v472
  %474 = vmatmul.f32.gmra.mxu0 %v263
  %v475 = vpop.f32.mrf.mxu0
  %v476 = vadd.f32 0.0, %v475
  %477 = vmatmul.f32.gmra.mxu0 %v266
  %v478 = vpop.f32.mrf.mxu0
  %v479 = vadd.f32 0.0, %v478
  %480 = vmatmul.f32.gmra.mxu0 %v269
  %v481 = vpop.f32.mrf.mxu0
  %v482 = vadd.f32 0.0, %v481
  %483 = vdwg.mxu0
  %vm484 = vcmask 15360
  %485 = vst.msk [vmem:[%s2] sm:$0xff] %vm484, %v293
  %486 = vst.msk [vmem:[%s2 + $0x8] sm:$0xff] %vm484, %v296
  %487 = vst.msk [vmem:[%s2 + $0x10] sm:$0xff] %vm484, %v299
  %488 = vst.msk [vmem:[%s2 + $0x18] sm:$0xff] %vm484, %v302
  %489 = vst.msk [vmem:[%s2 + $0x20] sm:$0xff] %vm484, %v305
  %490 = vst.msk [vmem:[%s2 + $0x28] sm:$0xff] %vm484, %v308
  %491 = vst.msk [vmem:[%s2 + $0x30] sm:$0xff] %vm484, %v311
  %492 = vst.msk [vmem:[%s2 + $0x38] sm:$0xff] %vm484, %v314
  %493 = vst.msk [vmem:[%s2 + $0x40] sm:$0xff] %vm484, %v317
  %494 = vst.msk [vmem:[%s2 + $0x48] sm:$0xff] %vm484, %v320
  %495 = vst.msk [vmem:[%s2 + $0x50] sm:$0xff] %vm484, %v323
  %496 = vst.msk [vmem:[%s2 + $0x58] sm:$0xff] %vm484, %v326
  %497 = vst.msk [vmem:[%s2 + $0x60] sm:$0xff] %vm484, %v329
  %498 = vst.msk [vmem:[%s2 + $0x68] sm:$0xff] %vm484, %v332
  %499 = vst.msk [vmem:[%s2 + $0x70] sm:$0xff] %vm484, %v335
  %500 = vst.msk [vmem:[%s2 + $0x78] sm:$0xff] %vm484, %v338
  %501 = vst.msk [vmem:[%s2 + $0x80] sm:$0xff] %vm484, %v341
  %502 = vst.msk [vmem:[%s2 + $0x88] sm:$0xff] %vm484, %v344
  %503 = vst.msk [vmem:[%s2 + $0x90] sm:$0xff] %vm484, %v347
  %504 = vst.msk [vmem:[%s2 + $0x98] sm:$0xff] %vm484, %v350
  %505 = vst.msk [vmem:[%s2 + $0xa0] sm:$0xff] %vm484, %v353
  %506 = vst.msk [vmem:[%s2 + $0xa8] sm:$0xff] %vm484, %v356
  %507 = vst.msk [vmem:[%s2 + $0xb0] sm:$0xff] %vm484, %v359
  %508 = vst.msk [vmem:[%s2 + $0xb8] sm:$0xff] %vm484, %v362
  %509 = vst.msk [vmem:[%s2 + $0xc0] sm:$0xff] %vm484, %v365
  %510 = vst.msk [vmem:[%s2 + $0xc8] sm:$0xff] %vm484, %v368
  %511 = vst.msk [vmem:[%s2 + $0xd0] sm:$0xff] %vm484, %v371
  %512 = vst.msk [vmem:[%s2 + $0xd8] sm:$0xff] %vm484, %v374
  %513 = vst.msk [vmem:[%s2 + $0xe0] sm:$0xff] %vm484, %v377
  %514 = vst.msk [vmem:[%s2 + $0xe8] sm:$0xff] %vm484, %v380
  %515 = vst.msk [vmem:[%s2 + $0xf0] sm:$0xff] %vm484, %v383
  %516 = vst.msk [vmem:[%s2 + $0xf8] sm:$0xff] %vm484, %v386
  %517 = vst.msk [vmem:[%s2 + $0x100] sm:$0xff] %vm484, %v389
  %518 = vst.msk [vmem:[%s2 + $0x108] sm:$0xff] %vm484, %v392
  %519 = vst.msk [vmem:[%s2 + $0x110] sm:$0xff] %vm484, %v395
  %520 = vst.msk [vmem:[%s2 + $0x118] sm:$0xff] %vm484, %v398
  %521 = vst.msk [vmem:[%s2 + $0x120] sm:$0xff] %vm484, %v401
  %522 = vst.msk [vmem:[%s2 + $0x128] sm:$0xff] %vm484, %v404
  %523 = vst.msk [vmem:[%s2 + $0x130] sm:$0xff] %vm484, %v407
  %524 = vst.msk [vmem:[%s2 + $0x138] sm:$0xff] %vm484, %v410
  %525 = vst.msk [vmem:[%s2 + $0x140] sm:$0xff] %vm484, %v413
  %526 = vst.msk [vmem:[%s2 + $0x148] sm:$0xff] %vm484, %v416
  %527 = vst.msk [vmem:[%s2 + $0x150] sm:$0xff] %vm484, %v419
  %528 = vst.msk [vmem:[%s2 + $0x158] sm:$0xff] %vm484, %v422
  %529 = vst.msk [vmem:[%s2 + $0x160] sm:$0xff] %vm484, %v425
  %530 = vst.msk [vmem:[%s2 + $0x168] sm:$0xff] %vm484, %v428
  %531 = vst.msk [vmem:[%s2 + $0x170] sm:$0xff] %vm484, %v431
  %532 = vst.msk [vmem:[%s2 + $0x178] sm:$0xff] %vm484, %v434
  %533 = vst.msk [vmem:[%s2 + $0x180] sm:$0xff] %vm484, %v437
  %534 = vst.msk [vmem:[%s2 + $0x188] sm:$0xff] %vm484, %v440
  %535 = vst.msk [vmem:[%s2 + $0x190] sm:$0xff] %vm484, %v443
  %536 = vst.msk [vmem:[%s2 + $0x198] sm:$0xff] %vm484, %v446
  %537 = vst.msk [vmem:[%s2 + $0x1a0] sm:$0xff] %vm484, %v449
  %538 = vst.msk [vmem:[%s2 + $0x1a8] sm:$0xff] %vm484, %v452
  %539 = vst.msk [vmem:[%s2 + $0x1b0] sm:$0xff] %vm484, %v455
  %540 = vst.msk [vmem:[%s2 + $0x1b8] sm:$0xff] %vm484, %v458
  %541 = vst.msk [vmem:[%s2 + $0x1c0] sm:$0xff] %vm484, %v461
  %542 = vst.msk [vmem:[%s2 + $0x1c8] sm:$0xff] %vm484, %v464
  %543 = vst.msk [vmem:[%s2 + $0x1d0] sm:$0xff] %vm484, %v467
  %544 = vst.msk [vmem:[%s2 + $0x1d8] sm:$0xff] %vm484, %v470
  %545 = vst.msk [vmem:[%s2 + $0x1e0] sm:$0xff] %vm484, %v473
  %546 = vst.msk [vmem:[%s2 + $0x1e8] sm:$0xff] %vm484, %v476
  %547 = vst.msk [vmem:[%s2 + $0x1f0] sm:$0xff] %vm484, %v479
  %548 = vst.msk [vmem:[%s2 + $0x1f8] sm:$0xff] %vm484, %v482
  %v549 = vsel %vm484, %v293, 0.0
  %v550 = vsel %vm484, %v296, 0.0
  %v551 = vadd.f32 %v549, %v550
  %v552 = vsel %vm484, %v299, 0.0
  %v553 = vadd.f32 %v551, %v552
  %v554 = vsel %vm484, %v302, 0.0
  %v555 = vadd.f32 %v553, %v554
  %v556 = vsel %vm484, %v305, 0.0
  %v557 = vadd.f32 %v555, %v556
  %v558 = vsel %vm484, %v308, 0.0
  %v559 = vadd.f32 %v557, %v558
  %v560 = vsel %vm484, %v311, 0.0
  %v561 = vadd.f32 %v559, %v560
  %v562 = vsel %vm484, %v314, 0.0
  %v563 = vadd.f32 %v561, %v562
  %v564 = vsel %vm484, %v317, 0.0
  %v565 = vadd.f32 %v563, %v564
  %v566 = vsel %vm484, %v320, 0.0
  %v567 = vadd.f32 %v565, %v566
  %v568 = vsel %vm484, %v323, 0.0
  %v569 = vadd.f32 %v567, %v568
  %v570 = vsel %vm484, %v326, 0.0
  %v571 = vadd.f32 %v569, %v570
  %v572 = vsel %vm484, %v329, 0.0
  %v573 = vadd.f32 %v571, %v572
  %v574 = vsel %vm484, %v332, 0.0
  %v575 = vadd.f32 %v573, %v574
  %v576 = vsel %vm484, %v335, 0.0
  %v577 = vadd.f32 %v575, %v576
  %v578 = vsel %vm484, %v338, 0.0
  %v579 = vadd.f32 %v577, %v578
  %v580 = vsel %vm484, %v341, 0.0
  %v581 = vadd.f32 %v579, %v580
  %v582 = vsel %vm484, %v344, 0.0
  %v583 = vadd.f32 %v581, %v582
  %v584 = vsel %vm484, %v347, 0.0
  %v585 = vadd.f32 %v583, %v584
  %v586 = vsel %vm484, %v350, 0.0
  %v587 = vadd.f32 %v585, %v586
  %v588 = vsel %vm484, %v353, 0.0
  %v589 = vadd.f32 %v587, %v588
  %v590 = vsel %vm484, %v356, 0.0
  %v591 = vadd.f32 %v589, %v590
  %v592 = vsel %vm484, %v359, 0.0
  %v593 = vadd.f32 %v591, %v592
  %v594 = vsel %vm484, %v362, 0.0
  %v595 = vadd.f32 %v593, %v594
  %v596 = vsel %vm484, %v365, 0.0
  %v597 = vadd.f32 %v595, %v596
  %v598 = vsel %vm484, %v368, 0.0
  %v599 = vadd.f32 %v597, %v598
  %v600 = vsel %vm484, %v371, 0.0
  %v601 = vadd.f32 %v599, %v600
  %v602 = vsel %vm484, %v374, 0.0
  %v603 = vadd.f32 %v601, %v602
  %v604 = vsel %vm484, %v377, 0.0
  %v605 = vadd.f32 %v603, %v604
  %v606 = vsel %vm484, %v380, 0.0
  %v607 = vadd.f32 %v605, %v606
  %v608 = vsel %vm484, %v383, 0.0
  %v609 = vadd.f32 %v607, %v608
  %v610 = vsel %vm484, %v386, 0.0
  %v611 = vadd.f32 %v609, %v610
  %v612 = vsel %vm484, %v389, 0.0
  %v613 = vadd.f32 %v611, %v612
  %v614 = vsel %vm484, %v392, 0.0
  %v615 = vadd.f32 %v613, %v614
  %v616 = vsel %vm484, %v395, 0.0
  %v617 = vadd.f32 %v615, %v616
  %v618 = vsel %vm484, %v398, 0.0
  %v619 = vadd.f32 %v617, %v618
  %v620 = vsel %vm484, %v401, 0.0
  %v621 = vadd.f32 %v619, %v620
  %v622 = vsel %vm484, %v404, 0.0
  %v623 = vadd.f32 %v621, %v622
  %v624 = vsel %vm484, %v407, 0.0
  %v625 = vadd.f32 %v623, %v624
  %v626 = vsel %vm484, %v410, 0.0
  %v627 = vadd.f32 %v625, %v626
  %v628 = vsel %vm484, %v413, 0.0
  %v629 = vadd.f32 %v627, %v628
  %v630 = vsel %vm484, %v416, 0.0
  %v631 = vadd.f32 %v629, %v630
  %v632 = vsel %vm484, %v419, 0.0
  %v633 = vadd.f32 %v631, %v632
  %v634 = vsel %vm484, %v422, 0.0
  %v635 = vadd.f32 %v633, %v634
  %v636 = vsel %vm484, %v425, 0.0
  %v637 = vadd.f32 %v635, %v636
  %v638 = vsel %vm484, %v428, 0.0
  %v639 = vadd.f32 %v637, %v638
  %v640 = vsel %vm484, %v431, 0.0
  %v641 = vadd.f32 %v639, %v640
  %v642 = vsel %vm484, %v434, 0.0
  %v643 = vadd.f32 %v641, %v642
  %v644 = vsel %vm484, %v437, 0.0
  %v645 = vadd.f32 %v643, %v644
  %v646 = vsel %vm484, %v440, 0.0
  %v647 = vadd.f32 %v645, %v646
  %v648 = vsel %vm484, %v443, 0.0
  %v649 = vadd.f32 %v647, %v648
  %v650 = vsel %vm484, %v446, 0.0
  %v651 = vadd.f32 %v649, %v650
  %v652 = vsel %vm484, %v449, 0.0
  %v653 = vadd.f32 %v651, %v652
  %v654 = vsel %vm484, %v452, 0.0
  %v655 = vadd.f32 %v653, %v654
  %v656 = vsel %vm484, %v455, 0.0
  %v657 = vadd.f32 %v655, %v656
  %v658 = vsel %vm484, %v458, 0.0
  %v659 = vadd.f32 %v657, %v658
  %v660 = vsel %vm484, %v461, 0.0
  %v661 = vadd.f32 %v659, %v660
  %v662 = vsel %vm484, %v464, 0.0
  %v663 = vadd.f32 %v661, %v662
  %v664 = vsel %vm484, %v467, 0.0
  %v665 = vadd.f32 %v663, %v664
  %v666 = vsel %vm484, %v470, 0.0
  %v667 = vadd.f32 %v665, %v666
  %v668 = vsel %vm484, %v473, 0.0
  %v669 = vadd.f32 %v667, %v668
  %v670 = vsel %vm484, %v476, 0.0
  %v671 = vadd.f32 %v669, %v670
  %v672 = vsel %vm484, %v479, 0.0
  %v673 = vadd.f32 %v671, %v672
  %v674 = vsel %vm484, %v482, 0.0
  %v675 = vadd.f32 %v673, %v674
  %v676 = vrot.slane %v675, 4
  %v677 = vadd.f32 %v675, %v676
  %v678 = vrot.slane %v677, 2
  %v679 = vadd.f32 %v677, %v678
  %v680 = vrot.slane %v679, 1
  %v681 = vadd.f32 %v679, %v680
  %vm682 = vcmask 8192
  %683 = vst.msk [vmem:[%s3] sm:$0x1] %vm682, %v681
  %v684 = vmul.f32 %v293, %v293
  %v685 = vmul.f32 %v296, %v296
  %v686 = vmul.f32 %v299, %v299
  %v687 = vmul.f32 %v302, %v302
  %v688 = vmul.f32 %v305, %v305
  %v689 = vmul.f32 %v308, %v308
  %v690 = vmul.f32 %v311, %v311
  %v691 = vmul.f32 %v314, %v314
  %v692 = vmul.f32 %v317, %v317
  %v693 = vmul.f32 %v320, %v320
  %v694 = vmul.f32 %v323, %v323
  %v695 = vmul.f32 %v326, %v326
  %v696 = vmul.f32 %v329, %v329
  %v697 = vmul.f32 %v332, %v332
  %v698 = vmul.f32 %v335, %v335
  %v699 = vmul.f32 %v338, %v338
  %v700 = vmul.f32 %v341, %v341
  %v701 = vmul.f32 %v344, %v344
  %v702 = vmul.f32 %v347, %v347
  %v703 = vmul.f32 %v350, %v350
  %v704 = vmul.f32 %v353, %v353
  %v705 = vmul.f32 %v356, %v356
  %v706 = vmul.f32 %v359, %v359
  %v707 = vmul.f32 %v362, %v362
  %v708 = vmul.f32 %v365, %v365
  %v709 = vmul.f32 %v368, %v368
  %v710 = vmul.f32 %v371, %v371
  %v711 = vmul.f32 %v374, %v374
  %v712 = vmul.f32 %v377, %v377
  %v713 = vmul.f32 %v380, %v380
  %v714 = vmul.f32 %v383, %v383
  %v715 = vmul.f32 %v386, %v386
  %v716 = vmul.f32 %v389, %v389
  %v717 = vmul.f32 %v392, %v392
  %v718 = vmul.f32 %v395, %v395
  %v719 = vmul.f32 %v398, %v398
  %v720 = vmul.f32 %v401, %v401
  %v721 = vmul.f32 %v404, %v404
  %v722 = vmul.f32 %v407, %v407
  %v723 = vmul.f32 %v410, %v410
  %v724 = vmul.f32 %v413, %v413
  %v725 = vmul.f32 %v416, %v416
  %v726 = vmul.f32 %v419, %v419
  %v727 = vmul.f32 %v422, %v422
  %v728 = vmul.f32 %v425, %v425
  %v729 = vmul.f32 %v428, %v428
  %v730 = vmul.f32 %v431, %v431
  %v731 = vmul.f32 %v434, %v434
  %v732 = vmul.f32 %v437, %v437
  %v733 = vmul.f32 %v440, %v440
  %v734 = vmul.f32 %v443, %v443
  %v735 = vmul.f32 %v446, %v446
  %v736 = vmul.f32 %v449, %v449
  %v737 = vmul.f32 %v452, %v452
  %v738 = vmul.f32 %v455, %v455
  %v739 = vmul.f32 %v458, %v458
  %v740 = vmul.f32 %v461, %v461
  %v741 = vmul.f32 %v464, %v464
  %v742 = vmul.f32 %v467, %v467
  %v743 = vmul.f32 %v470, %v470
  %v744 = vmul.f32 %v473, %v473
  %v745 = vmul.f32 %v476, %v476
  %v746 = vmul.f32 %v479, %v479
  %v747 = vmul.f32 %v482, %v482
  %v748 = vsel %vm484, %v684, 0.0
  %v749 = vsel %vm484, %v685, 0.0
  %v750 = vadd.f32 %v748, %v749
  %v751 = vsel %vm484, %v686, 0.0
  %v752 = vadd.f32 %v750, %v751
  %v753 = vsel %vm484, %v687, 0.0
  %v754 = vadd.f32 %v752, %v753
  %v755 = vsel %vm484, %v688, 0.0
  %v756 = vadd.f32 %v754, %v755
  %v757 = vsel %vm484, %v689, 0.0
  %v758 = vadd.f32 %v756, %v757
  %v759 = vsel %vm484, %v690, 0.0
  %v760 = vadd.f32 %v758, %v759
  %v761 = vsel %vm484, %v691, 0.0
  %v762 = vadd.f32 %v760, %v761
  %v763 = vsel %vm484, %v692, 0.0
  %v764 = vadd.f32 %v762, %v763
  %v765 = vsel %vm484, %v693, 0.0
  %v766 = vadd.f32 %v764, %v765
  %v767 = vsel %vm484, %v694, 0.0
  %v768 = vadd.f32 %v766, %v767
  %v769 = vsel %vm484, %v695, 0.0
  %v770 = vadd.f32 %v768, %v769
  %v771 = vsel %vm484, %v696, 0.0
  %v772 = vadd.f32 %v770, %v771
  %v773 = vsel %vm484, %v697, 0.0
  %v774 = vadd.f32 %v772, %v773
  %v775 = vsel %vm484, %v698, 0.0
  %v776 = vadd.f32 %v774, %v775
  %v777 = vsel %vm484, %v699, 0.0
  %v778 = vadd.f32 %v776, %v777
  %v779 = vsel %vm484, %v700, 0.0
  %v780 = vadd.f32 %v778, %v779
  %v781 = vsel %vm484, %v701, 0.0
  %v782 = vadd.f32 %v780, %v781
  %v783 = vsel %vm484, %v702, 0.0
  %v784 = vadd.f32 %v782, %v783
  %v785 = vsel %vm484, %v703, 0.0
  %v786 = vadd.f32 %v784, %v785
  %v787 = vsel %vm484, %v704, 0.0
  %v788 = vadd.f32 %v786, %v787
  %v789 = vsel %vm484, %v705, 0.0
  %v790 = vadd.f32 %v788, %v789
  %v791 = vsel %vm484, %v706, 0.0
  %v792 = vadd.f32 %v790, %v791
  %v793 = vsel %vm484, %v707, 0.0
  %v794 = vadd.f32 %v792, %v793
  %v795 = vsel %vm484, %v708, 0.0
  %v796 = vadd.f32 %v794, %v795
  %v797 = vsel %vm484, %v709, 0.0
  %v798 = vadd.f32 %v796, %v797
  %v799 = vsel %vm484, %v710, 0.0
  %v800 = vadd.f32 %v798, %v799
  %v801 = vsel %vm484, %v711, 0.0
  %v802 = vadd.f32 %v800, %v801
  %v803 = vsel %vm484, %v712, 0.0
  %v804 = vadd.f32 %v802, %v803
  %v805 = vsel %vm484, %v713, 0.0
  %v806 = vadd.f32 %v804, %v805
  %v807 = vsel %vm484, %v714, 0.0
  %v808 = vadd.f32 %v806, %v807
  %v809 = vsel %vm484, %v715, 0.0
  %v810 = vadd.f32 %v808, %v809
  %v811 = vsel %vm484, %v716, 0.0
  %v812 = vadd.f32 %v810, %v811
  %v813 = vsel %vm484, %v717, 0.0
  %v814 = vadd.f32 %v812, %v813
  %v815 = vsel %vm484, %v718, 0.0
  %v816 = vadd.f32 %v814, %v815
  %v817 = vsel %vm484, %v719, 0.0
  %v818 = vadd.f32 %v816, %v817
  %v819 = vsel %vm484, %v720, 0.0
  %v820 = vadd.f32 %v818, %v819
  %v821 = vsel %vm484, %v721, 0.0
  %v822 = vadd.f32 %v820, %v821
  %v823 = vsel %vm484, %v722, 0.0
  %v824 = vadd.f32 %v822, %v823
  %v825 = vsel %vm484, %v723, 0.0
  %v826 = vadd.f32 %v824, %v825
  %v827 = vsel %vm484, %v724, 0.0
  %v828 = vadd.f32 %v826, %v827
  %v829 = vsel %vm484, %v725, 0.0
  %v830 = vadd.f32 %v828, %v829
  %v831 = vsel %vm484, %v726, 0.0
  %v832 = vadd.f32 %v830, %v831
  %v833 = vsel %vm484, %v727, 0.0
  %v834 = vadd.f32 %v832, %v833
  %v835 = vsel %vm484, %v728, 0.0
  %v836 = vadd.f32 %v834, %v835
  %v837 = vsel %vm484, %v729, 0.0
  %v838 = vadd.f32 %v836, %v837
  %v839 = vsel %vm484, %v730, 0.0
  %v840 = vadd.f32 %v838, %v839
  %v841 = vsel %vm484, %v731, 0.0
  %v842 = vadd.f32 %v840, %v841
  %v843 = vsel %vm484, %v732, 0.0
  %v844 = vadd.f32 %v842, %v843
  %v845 = vsel %vm484, %v733, 0.0
  %v846 = vadd.f32 %v844, %v845
  %v847 = vsel %vm484, %v734, 0.0
  %v848 = vadd.f32 %v846, %v847
  %v849 = vsel %vm484, %v735, 0.0
  %v850 = vadd.f32 %v848, %v849
  %v851 = vsel %vm484, %v736, 0.0
  %v852 = vadd.f32 %v850, %v851
  %v853 = vsel %vm484, %v737, 0.0
  %v854 = vadd.f32 %v852, %v853
  %v855 = vsel %vm484, %v738, 0.0
  %v856 = vadd.f32 %v854, %v855
  %v857 = vsel %vm484, %v739, 0.0
  %v858 = vadd.f32 %v856, %v857
  %v859 = vsel %vm484, %v740, 0.0
  %v860 = vadd.f32 %v858, %v859
  %v861 = vsel %vm484, %v741, 0.0
  %v862 = vadd.f32 %v860, %v861
  %v863 = vsel %vm484, %v742, 0.0
  %v864 = vadd.f32 %v862, %v863
  %v865 = vsel %vm484, %v743, 0.0
  %v866 = vadd.f32 %v864, %v865
  %v867 = vsel %vm484, %v744, 0.0
  %v868 = vadd.f32 %v866, %v867
  %v869 = vsel %vm484, %v745, 0.0
  %v870 = vadd.f32 %v868, %v869
  %v871 = vsel %vm484, %v746, 0.0
  %v872 = vadd.f32 %v870, %v871
  %v873 = vsel %vm484, %v747, 0.0
  %v874 = vadd.f32 %v872, %v873
  %v875 = vrot.slane %v874, 4
  %v876 = vadd.f32 %v874, %v875
  %v877 = vrot.slane %v876, 2
  %v878 = vadd.f32 %v876, %v877
  %v879 = vrot.slane %v878, 1
  %v880 = vadd.f32 %v878, %v879
  %881 = vst.msk [vmem:[%s3 + $0x1] sm:$0x1] %vm682, %v880
  // Predicated region
  $region10: #{tpu_custom_call.1} parent=0 // pred_check
    _
  $region11: #{tpu_custom_call.1} parent=0 // pred_check_branch
    %883 = sbr.rel (0) target = $region13
  $region12: #{tpu_custom_call.1} parent=0 // pred_region
    _
  $region13: #{tpu_custom_call.1} parent=0 // pred_fallthru
    _
  // Predicated region
  $region14: #{tpu_custom_call.1} parent=0 // pred_check
    _
  $region15: #{tpu_custom_call.1} parent=0 // pred_check_branch
    %885 = sbr.rel (0) target = $region17
  $region16: #{tpu_custom_call.1} parent=0 // pred_region
    _
  $region17: #{tpu_custom_call.1} parent=0 // pred_fallthru
    _
  // Predicated region
  $region18: #{tpu_custom_call.1} parent=0 // pred_check
    _
  $region19: #{tpu_custom_call.1} parent=0 // pred_check_branch
    %887 = sbr.rel (0) target = $region21
  $region20: #{tpu_custom_call.1} parent=0 // pred_region
    _
  $region21: #{tpu_custom_call.1} parent=0 // pred_fallthru
    _
  // Predicated region
  $region22: #{tpu_custom_call.1} parent=0 // pred_check
    _
  $region23: #{tpu_custom_call.1} parent=0 // pred_check_branch
    %889 = sbr.rel (0) target = $region25
  $region24: #{tpu_custom_call.1} parent=0 // pred_region
    _
  $region25: #{tpu_custom_call.1} parent=0 // pred_fallthru
    _

</llo_original>
